<compile_context>
chip_gen: v5e
topology: v5e:2x2
jax: 0.10.0
libtpu: 0.0.40
codegen_flags: <defaults>
</compile_context>

<pallas_src>
import jax
import jax.numpy as jnp
from jax.experimental import pallas as pl
from jax.experimental.pallas import tpu as pltpu


def _round_up(v, m):
    return (v + m - 1) // m * m


def _linear_kernel(x_ref, w_ref, b_ref, o_ref):
    # One grid step = one (TM, K_pad) row tile; weight/bias are grid-invariant.
    acc = jnp.dot(x_ref[...], w_ref[...], preferred_element_type=jnp.float32)
    o_ref[...] = (acc + b_ref[...]).astype(o_ref.dtype)


def _build_call(M_pad, K_pad, D_pad, TM, out_dtype, single_buffer_weights):
    if single_buffer_weights:
        # Grid-invariant operands don't need double buffering.
        w_spec = pl.BlockSpec((K_pad, D_pad), lambda i: (0, 0),
                              pipeline_mode=pl.Buffered(1))
        b_spec = pl.BlockSpec((1, D_pad), lambda i: (0, 0),
                              pipeline_mode=pl.Buffered(1))
    else:
        w_spec = pl.BlockSpec((K_pad, D_pad), lambda i: (0, 0))
        b_spec = pl.BlockSpec((1, D_pad), lambda i: (0, 0))

    return pl.pallas_call(
        _linear_kernel,
        out_shape=jax.ShapeDtypeStruct((M_pad, D_pad), out_dtype),
        grid=(M_pad // TM,),
        in_specs=[
            pl.BlockSpec((TM, K_pad), lambda i: (i, 0)),   # x row tile
            w_spec,                                        # weight (resident)
            b_spec,                                        # bias   (resident)
        ],
        out_specs=pl.BlockSpec((TM, D_pad), lambda i: (i, 0)),
        compiler_params=pltpu.CompilerParams(
            dimension_semantics=("parallel",),
            vmem_limit_bytes=64 * 1024 * 1024,
        ),
    )


def pallas_linear(x2d, w, bias, *, row_tile=256):
    """y = x2d @ w + bias with lane-dense padding and row tiling.

    x2d: (M, K), w: (K, D) (transposed vs torch.nn.Linear), bias: (D,).
    """
    M, K = x2d.shape
    Kw, Dout = w.shape
    assert K == Kw, (K, Kw)

    # Lane-dense layout: pad features / outputs to multiples of 128, rows to x8.
    K_pad = _round_up(K, 128)
    D_pad = _round_up(Dout, 128)
    TM = min(row_tile, _round_up(M, 8))
    M_pad = _round_up(M, TM)

    x_p = jnp.pad(x2d, ((0, M_pad - M), (0, K_pad - K)))
    w_p = jnp.pad(w, ((0, K_pad - K), (0, D_pad - Dout)))
    b_p = jnp.pad(bias.reshape(1, Dout), ((0, 0), (0, D_pad - Dout)))

    # TODO(synk): for very large input_feats (>~4K) add a K grid axis with an
    # f32 VMEM accumulator instead of keeping the full weight resident (v7x VMEM).

    out_p, err = None, None
    for single_buf in (True, False):
        try:
            call = _build_call(M_pad, K_pad, D_pad, TM, x2d.dtype, single_buf)
            out_p = jax.block_until_ready(call(x_p, w_p, b_p))
            break
        except Exception as e:  # pl.Buffered(1) unsupported -> default double-buffering
            err = e
    if out_p is None:
        raise err
    return out_p[:M, :Dout]


def input_process(x, w, b, *, fc_type=None, input_feats=None):
    """InputProcess.forward. x: (b, f, n, d); w: (dim_in, latent); b: (latent,)."""
    bsz, f, n, d = x.shape
    if input_feats == 3:
        # 'b f n d -> (b f) n d' then .permute(1, 0, 2) -> (n, b*f, 3); Linear on last dim.
        rows = jnp.transpose(x.reshape(bsz * f, n, d), (1, 0, 2)).reshape(n * bsz * f, d)
        out = pallas_linear(rows, w, b)
        return out.reshape(n, bsz * f, -1)
    # 'conv1d' (1x1 conv over n*d channels) and the default Linear branch are the
    # same matmul: 'b f n d -> f b (n d)' @ W + bias -> (f, b, latent).
    rows = jnp.transpose(x, (1, 0, 2, 3)).reshape(f * bsz, n * d)
    out = pallas_linear(rows, w, b)
    return out.reshape(f, bsz, -1)


def _reference(x, w, b):
    bsz, f, n, d = x.shape
    x2 = jnp.transpose(x, (1, 0, 2, 3)).reshape(f, bsz, n * d)
    return x2 @ w + b


if __name__ == "__main__":
    # Small, deterministic setup for the default Linear branch.
    B, F, N, D = 2, 8, 4, 8          # x: (b, f, n, d)
    input_feats = N * D              # 32
    latent_dim = 32

    key = jax.random.PRNGKey(0)
    kx, kw, kb = jax.random.split(key, 3)

    x = jax.random.normal(kx, (B, F, N, D), dtype=jnp.float32)

    # Deterministic parameter init (PyTorch nn.Linear-like uniform bounds).
    bound = 1.0 / (input_feats ** 0.5)
    w = jax.random.uniform(kw, (input_feats, latent_dim), jnp.float32, -bound, bound)
    b = jax.random.uniform(kb, (latent_dim,), jnp.float32, -bound, bound)

    out = input_process(x, w, b, fc_type=None, input_feats=input_feats)
    out = jax.block_until_ready(out)

    ref = _reference(x, w, b)
    assert out.shape == (F, B, latent_dim), out.shape
    assert jnp.allclose(out, ref, atol=1e-5, rtol=1e-5), "mismatch vs reference"

    print("KERNEL_OK")
</pallas_src>

<mosaic_0001>
module attributes {stable_mosaic.version = 11 : i64} {
  func.func @_linear_kernel(%arg0: i32, %arg1: memref<16x128xf32, #tpu.memory_space<vmem>>, %arg2: memref<128x128xf32, #tpu.memory_space<vmem>>, %arg3: memref<1x128xf32, #tpu.memory_space<vmem>>, %arg4: memref<16x128xf32, #tpu.memory_space<vmem>>) attributes {dimension_semantics = [#tpu.dimension_semantics<parallel>], iteration_bounds = array<i64: 1>, scalar_prefetch = 0 : i64, scratch_operands = 0 : i64, tpu.core_type = #tpu.core_type<tc>, window_params = [{transform_indices = @transform_0, window_bounds = array<i64: 16, 128>}, {pipeline_mode = #tpu.pipeline_mode<synchronous>, transform_indices = @transform_1, window_bounds = array<i64: 128, 128>}, {pipeline_mode = #tpu.pipeline_mode<synchronous>, transform_indices = @transform_2, window_bounds = array<i64: 1, 128>}, {transform_indices = @transform_3, window_bounds = array<i64: 16, 128>}]} {
    %c0 = arith.constant 0 : index
    %c0_0 = arith.constant 0 : index
    %0 = vector.load %arg1[%c0, %c0_0] : memref<16x128xf32, #tpu.memory_space<vmem>>, vector<16x128xf32>
    %c0_1 = arith.constant 0 : index
    %c0_2 = arith.constant 0 : index
    %1 = vector.load %arg2[%c0_1, %c0_2] : memref<128x128xf32, #tpu.memory_space<vmem>>, vector<128x128xf32>
    %cst = arith.constant dense<0.000000e+00> : vector<16x128xf32>
    %2 = tpu.matmul %0, %1, %cst {dimension_numbers = #tpu.dot_dimension_numbers<[1], [0], [0], [1], [0, 0, 1, 1], [], []>} : vector<16x128xf32>, vector<128x128xf32>, vector<16x128xf32> -> vector<16x128xf32>
    %c0_3 = arith.constant 0 : index
    %c0_4 = arith.constant 0 : index
    %3 = vector.load %arg3[%c0_3, %c0_4] : memref<1x128xf32, #tpu.memory_space<vmem>>, vector<1x128xf32>
    %4 = vector.broadcast %3 : vector<1x128xf32> to vector<16x128xf32>
    %5 = arith.addf %2, %4 : vector<16x128xf32>
    %c0_5 = arith.constant 0 : index
    %c0_6 = arith.constant 0 : index
    %6 = vector.load %arg4[%c0_5, %c0_6] : memref<16x128xf32, #tpu.memory_space<vmem>>, vector<16x128xf32>
    tpu.vector_store %arg4[%c0_5, %c0_6], %5 {strides = array<i32>} : memref<16x128xf32, #tpu.memory_space<vmem>>, vector<16x128xf32>,
    return
  }
  func.func @transform_0(%arg0: i32) -> (i32, i32) {
    %c0_i32 = arith.constant 0 : i32
    %c0_i32_0 = arith.constant 0 : i32
    return %arg0, %c0_i32 : i32, i32
  }
  func.func @transform_1(%arg0: i32) -> (i32, i32) {
    %c0_i32 = arith.constant 0 : i32
    %c0_i32_0 = arith.constant 0 : i32
    %c0_i32_1 = arith.constant 0 : i32
    return %c0_i32, %c0_i32_0 : i32, i32
  }
  func.func @transform_2(%arg0: i32) -> (i32, i32) {
    %c0_i32 = arith.constant 0 : i32
    %c0_i32_0 = arith.constant 0 : i32
    %c0_i32_1 = arith.constant 0 : i32
    return %c0_i32, %c0_i32_0 : i32, i32
  }
  func.func @transform_3(%arg0: i32) -> (i32, i32) {
    %c0_i32 = arith.constant 0 : i32
    %c0_i32_0 = arith.constant 0 : i32
    return %arg0, %c0_i32 : i32, i32
  }
}

module attributes {stable_mosaic.version = 11 : i64} {
  func.func @_linear_kernel(%arg0: i32, %arg1: memref<16x128xf32, #tpu.memory_space<vmem>>, %arg2: memref<128x128xf32, #tpu.memory_space<vmem>>, %arg3: memref<1x128xf32, #tpu.memory_space<vmem>>, %arg4: memref<16x128xf32, #tpu.memory_space<vmem>>) attributes {dimension_semantics = [#tpu.dimension_semantics<parallel>], iteration_bounds = array<i64: 1>, scalar_prefetch = 0 : i64, scratch_operands = 0 : i64, tpu.core_type = #tpu.core_type<tc>, window_params = [{transform_indices = @transform_0, window_bounds = array<i64: 16, 128>}, {pipeline_mode = #tpu.pipeline_mode<synchronous>, transform_indices = @transform_1, window_bounds = array<i64: 128, 128>}, {pipeline_mode = #tpu.pipeline_mode<synchronous>, transform_indices = @transform_2, window_bounds = array<i64: 1, 128>}, {transform_indices = @transform_3, window_bounds = array<i64: 16, 128>}]} {
    %c0 = arith.constant 0 : index
    %c0_0 = arith.constant 0 : index
    %0 = vector.load %arg1[%c0, %c0_0] : memref<16x128xf32, #tpu.memory_space<vmem>>, vector<16x128xf32>
    %c0_1 = arith.constant 0 : index
    %c0_2 = arith.constant 0 : index
    %1 = vector.load %arg2[%c0_1, %c0_2] : memref<128x128xf32, #tpu.memory_space<vmem>>, vector<128x128xf32>
    %cst = arith.constant dense<0.000000e+00> : vector<16x128xf32>
    %2 = tpu.matmul %0, %1, %cst {dimension_numbers = #tpu.dot_dimension_numbers<[1], [0], [0], [1], [0, 0, 1, 1], [], []>} : vector<16x128xf32>, vector<128x128xf32>, vector<16x128xf32> -> vector<16x128xf32>
    %c0_3 = arith.constant 0 : index
    %c0_4 = arith.constant 0 : index
    %3 = vector.load %arg3[%c0_3, %c0_4] : memref<1x128xf32, #tpu.memory_space<vmem>>, vector<1x128xf32>
    %4 = vector.broadcast %3 : vector<1x128xf32> to vector<16x128xf32>
    %5 = arith.addf %2, %4 : vector<16x128xf32>
    %c0_5 = arith.constant 0 : index
    %c0_6 = arith.constant 0 : index
    %6 = vector.load %arg4[%c0_5, %c0_6] : memref<16x128xf32, #tpu.memory_space<vmem>>, vector<16x128xf32>
    tpu.vector_store %arg4[%c0_5, %c0_6], %5 {strides = array<i32>} : memref<16x128xf32, #tpu.memory_space<vmem>>, vector<16x128xf32>,
    return
  }
  func.func @transform_0(%arg0: i32) -> (i32, i32) {
    %c0_i32 = arith.constant 0 : i32
    %c0_i32_0 = arith.constant 0 : i32
    return %arg0, %c0_i32 : i32, i32
  }
  func.func @transform_1(%arg0: i32) -> (i32, i32) {
    %c0_i32 = arith.constant 0 : i32
    %c0_i32_0 = arith.constant 0 : i32
    %c0_i32_1 = arith.constant 0 : i32
    return %c0_i32, %c0_i32_0 : i32, i32
  }
  func.func @transform_2(%arg0: i32) -> (i32, i32) {
    %c0_i32 = arith.constant 0 : i32
    %c0_i32_0 = arith.constant 0 : i32
    %c0_i32_1 = arith.constant 0 : i32
    return %c0_i32, %c0_i32_0 : i32, i32
  }
  func.func @transform_3(%arg0: i32) -> (i32, i32) {
    %c0_i32 = arith.constant 0 : i32
    %c0_i32_0 = arith.constant 0 : i32
    return %arg0, %c0_i32 : i32, i32
  }
}

</mosaic_0001>

<llo_original>
// kernel: tpu_custom_call.1
$region0: #{tpu_custom_call.1}
  #allocation0 [shape = 'u32[]', space=smem, size = 0x4, offset = 0x4, fixed_abs, tag = 'smem constant byte address 0x4 - core index']
  #allocation1 [shape = 'u32[72,128]{1,0:T(1,128)}', space=vmem, size = 0x9000, scoped, tag = 'internal scratch']
  %s0 = inlined_call_operand.hbm [shape: f32[16,128], index: 0, kind: input, shape index: {}]
  %s1 = inlined_call_operand.hbm [shape: f32[128,128], index: 1, kind: input, shape index: {}]
  %s2 = inlined_call_operand.vmem [shape: f32[1,128], index: 2, kind: input, shape index: {}]
  %s3 = inlined_call_operand.hbm [shape: f32[16,128], index: 3, kind: output, shape index: {}]
  %s4 = sld [smem:[#allocation0]]
  $region30: #{tpu_custom_call.1} parent=0
    _
  %s6 = ssub.s32 1, %s4
  %s7 = scalar_select 0, %s6, %s4
  $region1: #{tpu_custom_call.1} parent=0
    #allocation2 [shape = 'u8[8192]{0}', space=vmem, size = 0x2000, scoped, tag = 'input window, operand 0, single buffered']
    #allocation3 [shape = 's32[1]{0}', space=sflag, size = 0x4, scoped, tag = 'scoped memory for tpu_custom_call.1']
    #allocation4 [shape = 's32[1]{0}', space=sflag, size = 0x4, scoped, tag = 'scoped memory for tpu_custom_call.1']
    #allocation5 [shape = 'u8[65536]{0}', space=vmem, size = 0x10000, scoped, tag = 'input window, operand 1, single buffered']
    #allocation6 [shape = 's32[1]{0}', space=sflag, size = 0x4, scoped, tag = 'scoped memory for tpu_custom_call.1']
    #allocation7 [shape = 'u8[8192]{0}', space=vmem, size = 0x2000, scoped, tag = 'output window, operand 0, single buffered']
    %8 = vsyncpa [#allocation3], 0
    %9 = vsyncpa [#allocation6], 0
    %10 = vsyncpa [#allocation4], 0
    // Predicated region
    $region2: #{tpu_custom_call.1} parent=1 // pred_check
      _
    $region3: #{tpu_custom_call.1} parent=1 // pred_check_branch
      %12 = sbr.rel (0) target = $region5
    $region4: #{tpu_custom_call.1} parent=1 // pred_region
      %14 = vsyncadd [#allocation3], 0
      %s15 = sshll.u32 %s0, 4
      %s16 = int_to_ptr.hbm [resolvable:$true] %s15
      %s17 = sshll.u32 [#allocation2], 4
      %s18 = int_to_ptr.vmem [resolvable:$true] %s17
      %23 = dma.hbm_to_vmem [thread:$0]  %s16, 256, %s18, [#allocation3], 128, 128, 8
    $region5: #{tpu_custom_call.1} parent=1 // pred_fallthru
      _
    // Predicated region
    $region6: #{tpu_custom_call.1} parent=1 // pred_check
      _
    $region7: #{tpu_custom_call.1} parent=1 // pred_check_branch
      %25 = sbr.rel (0) target = $region9
    $region8: #{tpu_custom_call.1} parent=1 // pred_region
      %27 = vsyncadd [#allocation6], 0
      %s28 = sshll.u32 %s1, 4
      %s29 = int_to_ptr.hbm [resolvable:$true] %s28
      %s30 = sshll.u32 [#allocation5], 4
      %s31 = int_to_ptr.vmem [resolvable:$true] %s30
      %36 = dma.hbm_to_vmem [thread:$0]  %s29, 2048, %s31, [#allocation6], 128, 128, 8
    $region9: #{tpu_custom_call.1} parent=1 // pred_fallthru
      _
    // Predicated region
    $region10: #{tpu_custom_call.1} parent=1 // pred_check
      _
    $region11: #{tpu_custom_call.1} parent=1 // pred_check_branch
      %38 = sbr.rel (0) target = $region13
    $region12: #{tpu_custom_call.1} parent=1 // pred_region
      _
    $region13: #{tpu_custom_call.1} parent=1 // pred_fallthru
      _
    // Predicated region
    $region14: #{tpu_custom_call.1} parent=1 // pred_check
      _
    $region15: #{tpu_custom_call.1} parent=1 // pred_check_branch
      %40 = sbr.rel (0) target = $region17
    $region16: #{tpu_custom_call.1} parent=1 // pred_region
      %42 = dma.done [#allocation3], 256
    $region17: #{tpu_custom_call.1} parent=1 // pred_fallthru
      _
    // Predicated region
    $region18: #{tpu_custom_call.1} parent=1 // pred_check
      _
    $region19: #{tpu_custom_call.1} parent=1 // pred_check_branch
      %44 = sbr.rel (0) target = $region21
    $region20: #{tpu_custom_call.1} parent=1 // pred_region
      %46 = dma.done [#allocation6], 2048
    $region21: #{tpu_custom_call.1} parent=1 // pred_fallthru
      _
    %v47 = vld [vmem:[#allocation2] sm:$0xff]
    %v48 = vld [vmem:[#allocation2 + $0x8] sm:$0xff]
    %v49 = vld [vmem:[#allocation5] sm:$0xff]
    %v50 = vld [vmem:[#allocation5 + $0x8] sm:$0xff]
    %v51 = vld [vmem:[#allocation5 + $0x10] sm:$0xff]
    %v52 = vld [vmem:[#allocation5 + $0x18] sm:$0xff]
    %v53 = vld [vmem:[#allocation5 + $0x20] sm:$0xff]
    %v54 = vld [vmem:[#allocation5 + $0x28] sm:$0xff]
    %v55 = vld [vmem:[#allocation5 + $0x30] sm:$0xff]
    %v56 = vld [vmem:[#allocation5 + $0x38] sm:$0xff]
    %v57 = vld [vmem:[#allocation5 + $0x40] sm:$0xff]
    %v58 = vld [vmem:[#allocation5 + $0x48] sm:$0xff]
    %v59 = vld [vmem:[#allocation5 + $0x50] sm:$0xff]
    %v60 = vld [vmem:[#allocation5 + $0x58] sm:$0xff]
    %v61 = vld [vmem:[#allocation5 + $0x60] sm:$0xff]
    %v62 = vld [vmem:[#allocation5 + $0x68] sm:$0xff]
    %v63 = vld [vmem:[#allocation5 + $0x70] sm:$0xff]
    %v64 = vld [vmem:[#allocation5 + $0x78] sm:$0xff]
    %v65 = vld [vmem:[%s2] sm:$0x1]
    %v67 = vperm.slane %v65, 0
    %69 = vmatpush.msra.mxu0 %v64
    %70 = vmatpush.msra.mxu0 %v63
    %71 = vmatpush.msra.mxu0 %v62
    %72 = vmatpush.msra.mxu0 %v61
    %73 = vmatpush.msra.mxu0 %v60
    %74 = vmatpush.msra.mxu0 %v59
    %75 = vmatpush.msra.mxu0 %v58
    %76 = vmatpush.msra.mxu0 %v57
    %77 = vmatpush.msra.mxu0 %v56
    %78 = vmatpush.msra.mxu0 %v55
    %79 = vmatpush.msra.mxu0 %v54
    %80 = vmatpush.msra.mxu0 %v53
    %81 = vmatpush.msra.mxu0 %v52
    %82 = vmatpush.msra.mxu0 %v51
    %83 = vmatpush.msra.mxu0 %v50
    %84 = vmatpush.msra.mxu0 %v49
    %85 = vmatmul.f32.gmra.mxu0 %v47
    %v86 = vpop.f32.mrf.mxu0
    %v87 = vadd.f32 %v67, %v86
    %88 = vmatmul.f32.gmra.mxu0 %v48
    %v89 = vpop.f32.mrf.mxu0
    %v90 = vadd.f32 %v67, %v89
    %91 = vdwg.mxu0
    %92 = vst [vmem:[#allocation7] sm:$0xff] %v87
    %93 = vst [vmem:[#allocation7 + $0x8] sm:$0xff] %v90
    // Predicated region
    $region22: #{tpu_custom_call.1} parent=1 // pred_check
      _
    $region23: #{tpu_custom_call.1} parent=1 // pred_check_branch
      %95 = sbr.rel (0) target = $region25
    $region24: #{tpu_custom_call.1} parent=1 // pred_region
      %97 = vsyncadd [#allocation4], 0
      %s98 = sshll.u32 [#allocation7], 4
      %s99 = int_to_ptr.vmem [resolvable:$true] %s98
      %s100 = sshll.u32 %s3, 4
      %s101 = int_to_ptr.hbm [resolvable:$true] %s100
      %106 = dma.vmem_to_hbm [thread:$0]  %s99, 256, %s101, [#allocation4], 128, 128, 8
    $region25: #{tpu_custom_call.1} parent=1 // pred_fallthru
      _
    // Predicated region
    $region26: #{tpu_custom_call.1} parent=1 // pred_check
      _
    $region27: #{tpu_custom_call.1} parent=1 // pred_check_branch
      %108 = sbr.rel (0) target = $region29
    $region28: #{tpu_custom_call.1} parent=1 // pred_region
      %110 = dma.done [#allocation4], 256
    $region29: #{tpu_custom_call.1} parent=1 // pred_fallthru
      _
    %111 = vsyncpa [#allocation3], 1
    %112 = vsyncpa [#allocation6], 1
    %113 = vsyncpa [#allocation4], 1

// kernel: tpu_custom_call.1
$region0: #{tpu_custom_call.1}
  #allocation0 [shape = 'u32[]', space=smem, size = 0x4, offset = 0x4, fixed_abs, tag = 'smem constant byte address 0x4 - core index']
  #allocation1 [shape = 'u32[72,128]{1,0:T(1,128)}', space=vmem, size = 0x9000, scoped, tag = 'internal scratch']
  %s0 = inlined_call_operand.hbm [shape: f32[16,128], index: 0, kind: input, shape index: {}]
  %s1 = inlined_call_operand.hbm [shape: f32[128,128], index: 1, kind: input, shape index: {}]
  %s2 = inlined_call_operand.vmem [shape: f32[1,128], index: 2, kind: input, shape index: {}]
  %s3 = inlined_call_operand.hbm [shape: f32[16,128], index: 3, kind: output, shape index: {}]
  %s4 = sld [smem:[#allocation0]]
  $region30: #{tpu_custom_call.1} parent=0
    _
  %s6 = ssub.s32 1, %s4
  %s7 = scalar_select 0, %s6, %s4
  $region1: #{tpu_custom_call.1} parent=0
    #allocation2 [shape = 'u8[8192]{0}', space=vmem, size = 0x2000, scoped, tag = 'input window, operand 0, single buffered']
    #allocation3 [shape = 's32[1]{0}', space=sflag, size = 0x4, scoped, tag = 'scoped memory for tpu_custom_call.1']
    #allocation4 [shape = 's32[1]{0}', space=sflag, size = 0x4, scoped, tag = 'scoped memory for tpu_custom_call.1']
    #allocation5 [shape = 'u8[65536]{0}', space=vmem, size = 0x10000, scoped, tag = 'input window, operand 1, single buffered']
    #allocation6 [shape = 's32[1]{0}', space=sflag, size = 0x4, scoped, tag = 'scoped memory for tpu_custom_call.1']
    #allocation7 [shape = 'u8[8192]{0}', space=vmem, size = 0x2000, scoped, tag = 'output window, operand 0, single buffered']
    %8 = vsyncpa [#allocation3], 0
    %9 = vsyncpa [#allocation6], 0
    %10 = vsyncpa [#allocation4], 0
    // Predicated region
    $region2: #{tpu_custom_call.1} parent=1 // pred_check
      _
    $region3: #{tpu_custom_call.1} parent=1 // pred_check_branch
      %12 = sbr.rel (0) target = $region5
    $region4: #{tpu_custom_call.1} parent=1 // pred_region
      %14 = vsyncadd [#allocation3], 0
      %s15 = sshll.u32 %s0, 4
      %s16 = int_to_ptr.hbm [resolvable:$true] %s15
      %s17 = sshll.u32 [#allocation2], 4
      %s18 = int_to_ptr.vmem [resolvable:$true] %s17
      %23 = dma.hbm_to_vmem [thread:$0]  %s16, 256, %s18, [#allocation3], 128, 128, 8
    $region5: #{tpu_custom_call.1} parent=1 // pred_fallthru
      _
    // Predicated region
    $region6: #{tpu_custom_call.1} parent=1 // pred_check
      _
    $region7: #{tpu_custom_call.1} parent=1 // pred_check_branch
      %25 = sbr.rel (0) target = $region9
    $region8: #{tpu_custom_call.1} parent=1 // pred_region
      %27 = vsyncadd [#allocation6], 0
      %s28 = sshll.u32 %s1, 4
      %s29 = int_to_ptr.hbm [resolvable:$true] %s28
      %s30 = sshll.u32 [#allocation5], 4
      %s31 = int_to_ptr.vmem [resolvable:$true] %s30
      %36 = dma.hbm_to_vmem [thread:$0]  %s29, 2048, %s31, [#allocation6], 128, 128, 8
    $region9: #{tpu_custom_call.1} parent=1 // pred_fallthru
      _
    // Predicated region
    $region10: #{tpu_custom_call.1} parent=1 // pred_check
      _
    $region11: #{tpu_custom_call.1} parent=1 // pred_check_branch
      %38 = sbr.rel (0) target = $region13
    $region12: #{tpu_custom_call.1} parent=1 // pred_region
      _
    $region13: #{tpu_custom_call.1} parent=1 // pred_fallthru
      _
    // Predicated region
    $region14: #{tpu_custom_call.1} parent=1 // pred_check
      _
    $region15: #{tpu_custom_call.1} parent=1 // pred_check_branch
      %40 = sbr.rel (0) target = $region17
    $region16: #{tpu_custom_call.1} parent=1 // pred_region
      %42 = dma.done [#allocation3], 256
    $region17: #{tpu_custom_call.1} parent=1 // pred_fallthru
      _
    // Predicated region
    $region18: #{tpu_custom_call.1} parent=1 // pred_check
      _
    $region19: #{tpu_custom_call.1} parent=1 // pred_check_branch
      %44 = sbr.rel (0) target = $region21
    $region20: #{tpu_custom_call.1} parent=1 // pred_region
      %46 = dma.done [#allocation6], 2048
    $region21: #{tpu_custom_call.1} parent=1 // pred_fallthru
      _
    %v47 = vld [vmem:[#allocation2] sm:$0xff]
    %v48 = vld [vmem:[#allocation2 + $0x8] sm:$0xff]
    %v49 = vld [vmem:[#allocation5] sm:$0xff]
    %v50 = vld [vmem:[#allocation5 + $0x8] sm:$0xff]
    %v51 = vld [vmem:[#allocation5 + $0x10] sm:$0xff]
    %v52 = vld [vmem:[#allocation5 + $0x18] sm:$0xff]
    %v53 = vld [vmem:[#allocation5 + $0x20] sm:$0xff]
    %v54 = vld [vmem:[#allocation5 + $0x28] sm:$0xff]
    %v55 = vld [vmem:[#allocation5 + $0x30] sm:$0xff]
    %v56 = vld [vmem:[#allocation5 + $0x38] sm:$0xff]
    %v57 = vld [vmem:[#allocation5 + $0x40] sm:$0xff]
    %v58 = vld [vmem:[#allocation5 + $0x48] sm:$0xff]
    %v59 = vld [vmem:[#allocation5 + $0x50] sm:$0xff]
    %v60 = vld [vmem:[#allocation5 + $0x58] sm:$0xff]
    %v61 = vld [vmem:[#allocation5 + $0x60] sm:$0xff]
    %v62 = vld [vmem:[#allocation5 + $0x68] sm:$0xff]
    %v63 = vld [vmem:[#allocation5 + $0x70] sm:$0xff]
    %v64 = vld [vmem:[#allocation5 + $0x78] sm:$0xff]
    %v65 = vld [vmem:[%s2] sm:$0x1]
    %v67 = vperm.slane %v65, 0
    %69 = vmatpush.msra.mxu0 %v64
    %70 = vmatpush.msra.mxu0 %v63
    %71 = vmatpush.msra.mxu0 %v62
    %72 = vmatpush.msra.mxu0 %v61
    %73 = vmatpush.msra.mxu0 %v60
    %74 = vmatpush.msra.mxu0 %v59
    %75 = vmatpush.msra.mxu0 %v58
    %76 = vmatpush.msra.mxu0 %v57
    %77 = vmatpush.msra.mxu0 %v56
    %78 = vmatpush.msra.mxu0 %v55
    %79 = vmatpush.msra.mxu0 %v54
    %80 = vmatpush.msra.mxu0 %v53
    %81 = vmatpush.msra.mxu0 %v52
    %82 = vmatpush.msra.mxu0 %v51
    %83 = vmatpush.msra.mxu0 %v50
    %84 = vmatpush.msra.mxu0 %v49
    %85 = vmatmul.f32.gmra.mxu0 %v47
    %v86 = vpop.f32.mrf.mxu0
    %v87 = vadd.f32 %v67, %v86
    %88 = vmatmul.f32.gmra.mxu0 %v48
    %v89 = vpop.f32.mrf.mxu0
    %v90 = vadd.f32 %v67, %v89
    %91 = vdwg.mxu0
    %92 = vst [vmem:[#allocation7] sm:$0xff] %v87
    %93 = vst [vmem:[#allocation7 + $0x8] sm:$0xff] %v90
    // Predicated region
    $region22: #{tpu_custom_call.1} parent=1 // pred_check
      _
    $region23: #{tpu_custom_call.1} parent=1 // pred_check_branch
      %95 = sbr.rel (0) target = $region25
    $region24: #{tpu_custom_call.1} parent=1 // pred_region
      %97 = vsyncadd [#allocation4], 0
      %s98 = sshll.u32 [#allocation7], 4
      %s99 = int_to_ptr.vmem [resolvable:$true] %s98
      %s100 = sshll.u32 %s3, 4
      %s101 = int_to_ptr.hbm [resolvable:$true] %s100
      %106 = dma.vmem_to_hbm [thread:$0]  %s99, 256, %s101, [#allocation4], 128, 128, 8
    $region25: #{tpu_custom_call.1} parent=1 // pred_fallthru
      _
    // Predicated region
    $region26: #{tpu_custom_call.1} parent=1 // pred_check
      _
    $region27: #{tpu_custom_call.1} parent=1 // pred_check_branch
      %108 = sbr.rel (0) target = $region29
    $region28: #{tpu_custom_call.1} parent=1 // pred_region
      %110 = dma.done [#allocation4], 256
    $region29: #{tpu_custom_call.1} parent=1 // pred_fallthru
      _
    %111 = vsyncpa [#allocation3], 1
    %112 = vsyncpa [#allocation6], 1
    %113 = vsyncpa [#allocation4], 1

</llo_original>
